<compile_context>
chip_gen: v7x
topology: tpu7x:2x2x1
jax: 0.10.0
libtpu: 0.0.40
codegen_flags: <defaults>
</compile_context>

<pallas_src>
import functools
import itertools

import jax
import jax.numpy as jnp
from jax import lax
from jax.experimental import pallas as pl
from jax.experimental.pallas import tpu as pltpu


# ----------------------------------------------------------------------------
# Tiling helpers
# ----------------------------------------------------------------------------
def _round_up(x, n):
    return ((x + n - 1) // n) * n


def _k_tiling(K):
    """K-tile size (multiple of 128) and padded K."""
    k_pad_min = _round_up(K, 128)
    k_tile = k_pad_min if k_pad_min <= 1024 else 512
    k_pad = _round_up(K, k_tile)
    return k_tile, k_pad


def _out_padding(output_dim):
    return _round_up(output_dim, 128)


def _batch_tiling(batch):
    b_tile = 512 if batch >= 512 else _round_up(batch, 8)
    b_pad = _round_up(batch, b_tile)
    return b_tile, b_pad


# ----------------------------------------------------------------------------
# Pallas kernel: one HCRLayer forward
#   grid = (num_batch_tiles [parallel], num_k_tiles [arbitrary reduction])
# ----------------------------------------------------------------------------
def _hcr_layer_kernel(x_ref, coef_ref, out_ref, t_ref, acc_ref, *,
                      input_dim, m, k_tile, num_k_tiles):
    k = pl.program_id(1)

    @pl.when(k == 0)
    def _init():
        # ---- orthonormal Legendre basis on [0,1], degrees 0..m (VPU work,
        # once per batch tile; tiny compared to the matmul below).
        x = x_ref[...].astype(jnp.float32)              # (B_TILE, input_dim)
        u = 2.0 * x - 1.0
        P = [jnp.ones_like(u)]
        if m >= 1:
            P.append(u)
        for j in range(1, m):
            P.append(((2.0 * j + 1.0) * u * P[j] - float(j) * P[j - 1]) / float(j + 1))
        basis = [float((2 * j + 1) ** 0.5) * P[j] for j in range(m + 1)]

        # ---- tensor-product feature matrix T, column ordering identical to
        # np.ravel_multi_index over (m+1,)*input_dim (last input dim fastest).
        # Built by processing dims from last to first with lane-axis concats
        # (avoids in-kernel 3-D reshapes).
        T = None
        for d in range(input_dim - 1, -1, -1):
            cols = [basis[j][:, d:d + 1] for j in range(m + 1)]   # (B_TILE, 1) each
            if T is None:
                T = jnp.concatenate(cols, axis=-1)                # (B_TILE, m+1)
            else:
                T = jnp.concatenate([c * T for c in cols], axis=-1)

        pad_cols = t_ref.shape[1] - T.shape[1]
        if pad_cols > 0:
            T = jnp.concatenate(
                [T, jnp.zeros((T.shape[0], pad_cols), jnp.float32)], axis=-1)
        t_ref[...] = T
        # density starts at 1 (the all-zero multi-index term is skipped; its
        # coefficient row is zeroed in the packed coef).
        acc_ref[...] = jnp.ones(acc_ref.shape, acc_ref.dtype)

    # ---- MXU matmul over this K tile, f32 accumulation.
    if num_k_tiles == 1:
        t_tile = t_ref[...]
    else:
        start = pl.multiple_of(k * k_tile, k_tile)
        t_tile = t_ref[:, pl.ds(start, k_tile)]
    acc_ref[...] += jnp.dot(
        t_tile, coef_ref[...],
        preferred_element_type=jnp.float32,
        precision=lax.Precision.HIGHEST,
    )

    @pl.when(k == pl.num_programs(1) - 1)
    def _finalize():
        out_ref[...] = acc_ref[...].astype(out_ref.dtype)


def pack_hcr_coefficients(coef, input_dim, output_dim, m):
    """Pre-pack torch-style (output_dim, K) coefficients once:
    transpose -> (K, output_dim), zero the flat==0 row (skipped by the model),
    pad to (K_pad, OUT_pad) with OUT_pad a multiple of 128."""
    K = (m + 1) ** input_dim
    assert coef.shape == (output_dim, K)
    _, k_pad = _k_tiling(K)
    out_pad = _out_padding(output_dim)
    c = jnp.asarray(coef, jnp.float32).T                 # (K, output_dim)
    c = c.at[0, :].set(0.0)                              # flat==0 term is skipped
    packed = jnp.zeros((k_pad, out_pad), jnp.float32)
    packed = packed.at[:K, :output_dim].set(c)
    return packed


def hcr_layer_forward(x, packed_coef, *, input_dim, output_dim, m):
    """One HCRLayer forward. x: (batch, input_dim); packed_coef from pack_hcr_coefficients."""
    batch = x.shape[0]
    assert x.shape[1] == input_dim
    K = (m + 1) ** input_dim
    k_tile, k_pad = _k_tiling(K)
    out_pad = _out_padding(output_dim)
    assert packed_coef.shape == (k_pad, out_pad)

    b_tile, b_pad = _batch_tiling(batch)
    xp = jnp.zeros((b_pad, input_dim), jnp.float32).at[:batch].set(
        jnp.asarray(x, jnp.float32))

    nb = b_pad // b_tile
    nk = k_pad // k_tile

    kernel = functools.partial(
        _hcr_layer_kernel, input_dim=input_dim, m=m,
        k_tile=k_tile, num_k_tiles=nk)

    # VMEM budget: double-buffered blocks + T/acc scratch. Only raise the
    # scoped limit when actually needed (keeps default behavior on all gens).
    vmem_need = 4 * (2 * (b_tile * input_dim + k_tile * out_pad + b_tile * out_pad)
                     + b_tile * k_pad + b_tile * out_pad)
    cp = dict(dimension_semantics=("parallel", "arbitrary"))
    if vmem_need > 32 * 1024 * 1024:
        cp["vmem_limit_bytes"] = int(vmem_need * 1.25)

    out = pl.pallas_call(
        kernel,
        out_shape=jax.ShapeDtypeStruct((b_pad, out_pad), jnp.float32),
        grid=(nb, nk),
        in_specs=[
            pl.BlockSpec((b_tile, input_dim), lambda b, k: (b, 0)),
            pl.BlockSpec((k_tile, out_pad), lambda b, k: (k, 0)),
        ],
        out_specs=pl.BlockSpec((b_tile, out_pad), lambda b, k: (b, 0)),
        scratch_shapes=[
            pltpu.VMEM((b_tile, k_pad), jnp.float32),    # tensor-product features T
            pltpu.VMEM((b_tile, out_pad), jnp.float32),  # f32 accumulator
        ],
        compiler_params=pltpu.CompilerParams(**cp),
        cost_estimate=pl.CostEstimate(
            flops=2 * b_pad * k_pad * out_pad,
            transcendentals=0,
            bytes_accessed=4 * (b_pad * input_dim + k_pad * out_pad + b_pad * out_pad),
        ),
    )(xp, packed_coef)
    return out[:batch, :output_dim]


# ----------------------------------------------------------------------------
# HCRNN = chain of HCRLayers
# ----------------------------------------------------------------------------
def init_hcrnn_params(key, layer_dims, m, scale=1.0):
    layers = []
    for i in range(len(layer_dims) - 1):
        key, sub = jax.random.split(key)
        in_d, out_d = layer_dims[i], layer_dims[i + 1]
        coef = scale * jax.random.normal(
            sub, (out_d, (m + 1) ** in_d), dtype=jnp.float32)
        layers.append(dict(
            coef=coef,
            packed=pack_hcr_coefficients(coef, in_d, out_d, m),
            input_dim=in_d,
            output_dim=out_d,
        ))
    return layers


def hcrnn_forward(x, layers, m):
    for layer in layers:
        x = hcr_layer_forward(
            x, layer["packed"],
            input_dim=layer["input_dim"], output_dim=layer["output_dim"], m=m)
    return x


# ----------------------------------------------------------------------------
# Pure-JAX reference (mirrors the PyTorch loop) for a correctness check
# ----------------------------------------------------------------------------
def _legendre_basis_ref(x, m):
    u = 2.0 * x - 1.0
    P = [jnp.ones_like(u)]
    if m >= 1:
        P.append(u)
    for j in range(1, m):
        P.append(((2.0 * j + 1.0) * u * P[j] - float(j) * P[j - 1]) / float(j + 1))
    return jnp.stack([float((2 * j + 1) ** 0.5) * P[j] for j in range(m + 1)], axis=-1)


def _hcr_layer_ref(x, coef, m):
    batch, input_dim = x.shape
    output_dim = coef.shape[0]
    basis = _legendre_basis_ref(x, m)           # (batch, input_dim, m+1)
    density = jnp.ones((batch, output_dim), jnp.float32)
    for flat, idx in enumerate(itertools.product(range(m + 1), repeat=input_dim)):
        if sum(idx) == 0:
            continue
        b_slice = jnp.prod(basis[:, jnp.arange(input_dim), jnp.array(idx)], axis=1)
        density = density + coef[:, flat][None, :] * b_slice[:, None]
    return density


def _hcrnn_ref(x, layers, m):
    for layer in layers:
        x = _hcr_layer_ref(x, layer["coef"], m)
    return x


# ----------------------------------------------------------------------------
if __name__ == "__main__":
    key = jax.random.PRNGKey(0)
    layer_dims = [4, 3, 2]
    m = 2
    batch = 8

    k_x, k_p = jax.random.split(key)
    x = jax.random.uniform(k_x, (batch, layer_dims[0]), dtype=jnp.float32)
    # scale=0.1 keeps chained polynomial activations in a numerically sane
    # range for the f32 tolerance check (forward semantics unchanged).
    layers = init_hcrnn_params(k_p, layer_dims, m, scale=0.1)

    out = jax.block_until_ready(hcrnn_forward(x, layers, m))
    ref = jax.block_until_ready(_hcrnn_ref(x, layers, m))

    assert out.shape == (batch, layer_dims[-1])
    assert jnp.allclose(out, ref, rtol=2e-3, atol=2e-3), (out, ref)

    print("KERNEL_OK")
</pallas_src>

<mosaic_0001>
module attributes {stable_mosaic.version = 11 : i64} {
  func.func @_hcr_layer_kernel(%arg0: i32, %arg1: i32, %arg2: memref<8x4xf32, #tpu.memory_space<vmem>>, %arg3: memref<128x128xf32, #tpu.memory_space<vmem>>, %arg4: memref<8x128xf32, #tpu.memory_space<vmem>>, %arg5: memref<8x128xf32, #tpu.memory_space<vmem>>, %arg6: memref<8x128xf32, #tpu.memory_space<vmem>>) attributes {dimension_semantics = [#tpu.dimension_semantics<parallel>, #tpu.dimension_semantics<arbitrary>], iteration_bounds = array<i64: 1, 1>, scalar_prefetch = 0 : i64, scratch_operands = 2 : i64, tpu.core_type = #tpu.core_type<tc>, window_params = [{transform_indices = @transform_0, window_bounds = array<i64: 8, 4>}, {transform_indices = @transform_1, window_bounds = array<i64: 128, 128>}, {transform_indices = @transform_2, window_bounds = array<i64: 8, 128>}]} {
    %c0_i32 = arith.constant 0 : i32
    %0 = arith.cmpi eq, %arg1, %c0_i32 : i32
    %1 = arith.extui %0 : i1 to i32
    %c0_i32_0 = arith.constant 0 : i32
    %2 = arith.cmpi ne, %1, %c0_i32_0 : i32
    scf.if %2 {
      %c0_10 = arith.constant 0 : index
      %c0_11 = arith.constant 0 : index
      %12 = vector.load %arg2[%c0_10, %c0_11] : memref<8x4xf32, #tpu.memory_space<vmem>>, vector<8x4xf32>
      %cst_12 = arith.constant 2.000000e+00 : f32
      %13 = vector.broadcast %cst_12 : f32 to vector<8x4xf32>
      %14 = arith.mulf %13, %12 : vector<8x4xf32>
      %cst_13 = arith.constant 1.000000e+00 : f32
      %15 = vector.broadcast %cst_13 : f32 to vector<8x4xf32>
      %16 = arith.subf %14, %15 : vector<8x4xf32>
      %cst_14 = arith.constant 1.000000e+00 : f32
      %17 = vector.broadcast %cst_14 : f32 to vector<8x4xf32>
      %cst_15 = arith.constant 3.000000e+00 : f32
      %18 = vector.broadcast %cst_15 : f32 to vector<8x4xf32>
      %19 = arith.mulf %18, %16 : vector<8x4xf32>
      %20 = arith.mulf %19, %16 : vector<8x4xf32>
      %cst_16 = arith.constant 1.000000e+00 : f32
      %21 = vector.broadcast %cst_16 : f32 to vector<8x4xf32>
      %22 = arith.mulf %21, %17 : vector<8x4xf32>
      %23 = arith.subf %20, %22 : vector<8x4xf32>
      %cst_17 = arith.constant 2.000000e+00 : f32
      %24 = vector.broadcast %cst_17 : f32 to vector<8x4xf32>
      %25 = arith.divf %23, %24 : vector<8x4xf32>
      %cst_18 = arith.constant 1.000000e+00 : f32
      %26 = vector.broadcast %cst_18 : f32 to vector<8x4xf32>
      %27 = arith.mulf %26, %17 : vector<8x4xf32>
      %cst_19 = arith.constant 1.73205078 : f32
      %28 = vector.broadcast %cst_19 : f32 to vector<8x4xf32>
      %29 = arith.mulf %28, %16 : vector<8x4xf32>
      %cst_20 = arith.constant 2.23606801 : f32
      %30 = vector.broadcast %cst_20 : f32 to vector<8x4xf32>
      %31 = arith.mulf %30, %25 : vector<8x4xf32>
      %32 = vector.extract_strided_slice %27 {offsets = [0, 3], sizes = [8, 1], strides = [1, 1]} : vector<8x4xf32> to vector<8x1xf32>
      %33 = vector.extract_strided_slice %29 {offsets = [0, 3], sizes = [8, 1], strides = [1, 1]} : vector<8x4xf32> to vector<8x1xf32>
      %34 = vector.extract_strided_slice %31 {offsets = [0, 3], sizes = [8, 1], strides = [1, 1]} : vector<8x4xf32> to vector<8x1xf32>
      %35 = tpu.concatenate %32, %33, %34 in 1 : vector<8x1xf32>, vector<8x1xf32>, vector<8x1xf32> -> vector<8x3xf32>
      %36 = vector.extract_strided_slice %27 {offsets = [0, 2], sizes = [8, 1], strides = [1, 1]} : vector<8x4xf32> to vector<8x1xf32>
      %37 = vector.extract_strided_slice %29 {offsets = [0, 2], sizes = [8, 1], strides = [1, 1]} : vector<8x4xf32> to vector<8x1xf32>
      %38 = vector.extract_strided_slice %31 {offsets = [0, 2], sizes = [8, 1], strides = [1, 1]} : vector<8x4xf32> to vector<8x1xf32>
      %39 = vector.broadcast %36 : vector<8x1xf32> to vector<8x3xf32>
      %40 = arith.mulf %39, %35 : vector<8x3xf32>
      %41 = vector.broadcast %37 : vector<8x1xf32> to vector<8x3xf32>
      %42 = arith.mulf %41, %35 : vector<8x3xf32>
      %43 = vector.broadcast %38 : vector<8x1xf32> to vector<8x3xf32>
      %44 = arith.mulf %43, %35 : vector<8x3xf32>
      %45 = tpu.concatenate %40, %42, %44 in 1 : vector<8x3xf32>, vector<8x3xf32>, vector<8x3xf32> -> vector<8x9xf32>
      %46 = vector.extract_strided_slice %27 {offsets = [0, 1], sizes = [8, 1], strides = [1, 1]} : vector<8x4xf32> to vector<8x1xf32>
      %47 = vector.extract_strided_slice %29 {offsets = [0, 1], sizes = [8, 1], strides = [1, 1]} : vector<8x4xf32> to vector<8x1xf32>
      %48 = vector.extract_strided_slice %31 {offsets = [0, 1], sizes = [8, 1], strides = [1, 1]} : vector<8x4xf32> to vector<8x1xf32>
      %49 = vector.broadcast %46 : vector<8x1xf32> to vector<8x9xf32>
      %50 = arith.mulf %49, %45 : vector<8x9xf32>
      %51 = vector.broadcast %47 : vector<8x1xf32> to vector<8x9xf32>
      %52 = arith.mulf %51, %45 : vector<8x9xf32>
      %53 = vector.broadcast %48 : vector<8x1xf32> to vector<8x9xf32>
      %54 = arith.mulf %53, %45 : vector<8x9xf32>
      %55 = tpu.concatenate %50, %52, %54 in 1 : vector<8x9xf32>, vector<8x9xf32>, vector<8x9xf32> -> vector<8x27xf32>
      %56 = vector.extract_strided_slice %27 {offsets = [0, 0], sizes = [8, 1], strides = [1, 1]} : vector<8x4xf32> to vector<8x1xf32>
      %57 = vector.extract_strided_slice %29 {offsets = [0, 0], sizes = [8, 1], strides = [1, 1]} : vector<8x4xf32> to vector<8x1xf32>
      %58 = vector.extract_strided_slice %31 {offsets = [0, 0], sizes = [8, 1], strides = [1, 1]} : vector<8x4xf32> to vector<8x1xf32>
      %59 = vector.broadcast %56 : vector<8x1xf32> to vector<8x27xf32>
      %60 = arith.mulf %59, %55 : vector<8x27xf32>
      %61 = vector.broadcast %57 : vector<8x1xf32> to vector<8x27xf32>
      %62 = arith.mulf %61, %55 : vector<8x27xf32>
      %63 = vector.broadcast %58 : vector<8x1xf32> to vector<8x27xf32>
      %64 = arith.mulf %63, %55 : vector<8x27xf32>
      %65 = tpu.concatenate %60, %62, %64 in 1 : vector<8x27xf32>, vector<8x27xf32>, vector<8x27xf32> -> vector<8x81xf32>
      %cst_21 = arith.constant 0.000000e+00 : f32
      %66 = vector.broadcast %cst_21 : f32 to vector<8x47xf32>
      %67 = tpu.concatenate %65, %66 in 1 : vector<8x81xf32>, vector<8x47xf32> -> vector<8x128xf32>
      %c0_22 = arith.constant 0 : index
      %c0_23 = arith.constant 0 : index
      %68 = vector.load %arg5[%c0_22, %c0_23] : memref<8x128xf32, #tpu.memory_space<vmem>>, vector<8x128xf32>
      tpu.vector_store %arg5[%c0_22, %c0_23], %67 {strides = array<i32>} : memref<8x128xf32, #tpu.memory_space<vmem>>, vector<8x128xf32>,
      %cst_24 = arith.constant 1.000000e+00 : f32
      %69 = vector.broadcast %cst_24 : f32 to vector<8x128xf32>
      %c0_25 = arith.constant 0 : index
      %c0_26 = arith.constant 0 : index
      %70 = vector.load %arg6[%c0_25, %c0_26] : memref<8x128xf32, #tpu.memory_space<vmem>>, vector<8x128xf32>
      tpu.vector_store %arg6[%c0_25, %c0_26], %69 {strides = array<i32>} : memref<8x128xf32, #tpu.memory_space<vmem>>, vector<8x128xf32>,
    } else {
    }
    %c0 = arith.constant 0 : index
    %c0_1 = arith.constant 0 : index
    %3 = vector.load %arg5[%c0, %c0_1] : memref<8x128xf32, #tpu.memory_space<vmem>>, vector<8x128xf32>
    %c0_2 = arith.constant 0 : index
    %c0_3 = arith.constant 0 : index
    %4 = vector.load %arg6[%c0_2, %c0_3] : memref<8x128xf32, #tpu.memory_space<vmem>>, vector<8x128xf32>
    %c0_4 = arith.constant 0 : index
    %c0_5 = arith.constant 0 : index
    %5 = vector.load %arg3[%c0_4, %c0_5] : memref<128x128xf32, #tpu.memory_space<vmem>>, vector<128x128xf32>
    %cst = arith.constant dense<0.000000e+00> : vector<8x128xf32>
    %6 = tpu.matmul %3, %5, %cst {dimension_numbers = #tpu.dot_dimension_numbers<[1], [0], [0], [1], [0, 0, 1, 1], [], []>, precision = #tpu.contract_precision<fp32>} : vector<8x128xf32>, vector<128x128xf32>, vector<8x128xf32> -> vector<8x128xf32>
    %7 = arith.addf %4, %6 : vector<8x128xf32>
    %c0_6 = arith.constant 0 : index
    %c0_7 = arith.constant 0 : index
    %8 = vector.load %arg6[%c0_6, %c0_7] : memref<8x128xf32, #tpu.memory_space<vmem>>, vector<8x128xf32>
    tpu.vector_store %arg6[%c0_6, %c0_7], %7 {strides = array<i32>} : memref<8x128xf32, #tpu.memory_space<vmem>>, vector<8x128xf32>,
    %c0_i32_8 = arith.constant 0 : i32
    %9 = arith.cmpi eq, %arg1, %c0_i32_8 : i32
    %10 = arith.extui %9 : i1 to i32
    %c0_i32_9 = arith.constant 0 : i32
    %11 = arith.cmpi ne, %10, %c0_i32_9 : i32
    scf.if %11 {
      %c0_10 = arith.constant 0 : index
      %c0_11 = arith.constant 0 : index
      %12 = vector.load %arg6[%c0_10, %c0_11] : memref<8x128xf32, #tpu.memory_space<vmem>>, vector<8x128xf32>
      %c0_12 = arith.constant 0 : index
      %c0_13 = arith.constant 0 : index
      %13 = vector.load %arg4[%c0_12, %c0_13] : memref<8x128xf32, #tpu.memory_space<vmem>>, vector<8x128xf32>
      tpu.vector_store %arg4[%c0_12, %c0_13], %12 {strides = array<i32>} : memref<8x128xf32, #tpu.memory_space<vmem>>, vector<8x128xf32>,
    } else {
    }
    return
  }
  func.func @transform_0(%arg0: i32, %arg1: i32) -> (i32, i32) {
    %c0_i32 = arith.constant 0 : i32
    %c0_i32_0 = arith.constant 0 : i32
    return %arg0, %c0_i32 : i32, i32
  }
  func.func @transform_1(%arg0: i32, %arg1: i32) -> (i32, i32) {
    %c0_i32 = arith.constant 0 : i32
    %c0_i32_0 = arith.constant 0 : i32
    return %arg1, %c0_i32 : i32, i32
  }
  func.func @transform_2(%arg0: i32, %arg1: i32) -> (i32, i32) {
    %c0_i32 = arith.constant 0 : i32
    %c0_i32_0 = arith.constant 0 : i32
    return %arg0, %c0_i32 : i32, i32
  }
}

</mosaic_0001>

<llo_original>
// kernel: tpu_custom_call.1
$region0: #{tpu_custom_call.1}
  #allocation0 [shape = 'u32[]', space=smem, size = 0x4, offset = 0x4, fixed_abs, tag = 'smem constant byte address 0x4 - core index']
  #allocation1 [shape = 'u32[144,128]{1,0:T(1,128)}', space=vmem, size = 0x12000, scoped, tag = 'internal scratch']
  #allocation2 [shape = 'f32[8,128]{1,0:T(8,128)}', space=vmem, size = 0x1000, scoped, tag = 'scratch operand']
  #allocation3 [shape = 'f32[8,128]{1,0:T(8,128)}', space=vmem, size = 0x1000, scoped, tag = 'scratch operand']
  %s0 = inlined_call_operand.vmem [shape: f32[8,4], index: 0, kind: input, shape index: {}]
  %s1 = inlined_call_operand.hbm [shape: f32[128,128], index: 1, kind: input, shape index: {}]
  %s2 = inlined_call_operand.hbm [shape: f32[8,128], index: 2, kind: output, shape index: {}]
  %s3 = sld [smem:[#allocation0]]
  $region30: #{tpu_custom_call.1} parent=0
    _
  %s5 = ssub.s32 1, %s3
  %s6 = scalar_select 0, %s5, %s3
  $region1: #{tpu_custom_call.1} parent=0
    #allocation4 [shape = 'u8[65536]{0}', space=vmem, size = 0x10000, scoped, tag = 'input window, operand 1, single buffered']
    #allocation5 [shape = 's32[1]{0}', space=sflag, size = 0x4, scoped, tag = 'scoped memory for tpu_custom_call.1']
    #allocation6 [shape = 's32[1]{0}', space=sflag, size = 0x4, scoped, tag = 'scoped memory for tpu_custom_call.1']
    #allocation7 [shape = 'u8[4096]{0}', space=vmem, size = 0x1000, scoped, tag = 'output window, operand 0, single buffered']
    %7 = vsyncpa [#allocation5], 0
    %8 = vsyncpa [#allocation6], 0
    // Predicated region
    $region2: #{tpu_custom_call.1} parent=1 // pred_check
      _
    $region3: #{tpu_custom_call.1} parent=1 // pred_check_branch
      %10 = sbr.rel (0) target = $region5
    $region4: #{tpu_custom_call.1} parent=1 // pred_region
      _
    $region5: #{tpu_custom_call.1} parent=1 // pred_fallthru
      _
    // Predicated region
    $region6: #{tpu_custom_call.1} parent=1 // pred_check
      _
    $region7: #{tpu_custom_call.1} parent=1 // pred_check_branch
      %12 = sbr.rel (0) target = $region9
    $region8: #{tpu_custom_call.1} parent=1 // pred_region
      %s14 = ssub.s32 2048, 2048
      %15 = vsyncadd [#allocation5], %s14
      %s16 = sshll.u32 [#allocation4], 4
      %s17 = int_to_ptr.vmem [resolvable:$true] %s16
      %22 = dma.hbm_to_vmem [thread:$0]  %s1, 2048, %s17, [#allocation5], 128, 128, 8
    $region9: #{tpu_custom_call.1} parent=1 // pred_fallthru
      _
    // Predicated region
    $region10: #{tpu_custom_call.1} parent=1 // pred_check
      _
    $region11: #{tpu_custom_call.1} parent=1 // pred_check_branch
      %24 = sbr.rel (0) target = $region13
    $region12: #{tpu_custom_call.1} parent=1 // pred_region
      %25 = dma.done [#allocation5], 2048
    $region13: #{tpu_custom_call.1} parent=1 // pred_fallthru
      _
    %p26 = scmp.eq.s32.totalorder 0, 0
    // Predicated region
    $region14: #{tpu_custom_call.1} parent=1 // pred_check
      %p27 = pneg %p26
    $region15: #{tpu_custom_call.1} parent=1 // pred_check_branch
      %29 = sbr.rel (%p27) target = $region17
    $region16: #{tpu_custom_call.1} parent=1 // pred_region
      %v30 = vld [vmem:[%s0] sm:$0xff]
      %v31 = vmul.f32 %v30, 2.0
      %v32 = vsub.f32 %v31, 1.0
      %v33 = vmul.f32 %v32, 3.0
      %v34 = vmul.f32 %v33, %v32
      %v35 = vsub.f32 %v34, 1.0
      %v36 = vrcp.pop 2.0
      %v37 = vmul.f32 %v35, %v36
      %v38 = vmul.f32 %v32, 1.7320508
      %v39 = vmul.f32 %v37, 2.236068
      %41 = vrot.lane.b32.xlu0 %v38, 126
      %v42 = vpop.permute.xlu0 %41
      %45 = vrot.lane.b32.xlu0 %v39, 127
      %v46 = vpop.permute.xlu0 %45
      %vm48 = vcmask 7168
      %v49 = vsel %vm48, 1.0, %v42
      %vm50 = vcmask 15360
      %v51 = vsel %vm50, %v49, %v46
      %52 = vset.pattern.permute.xlu0 2
      %53 = vperm.xlu0 %52, %v38
      %v54 = vpop.permute.xlu0 %53
      %v56 = vmul.f32 %v54, %v51
      %57 = vset.pattern.permute.xlu0 2
      %58 = vperm.xlu0 %57, %v39
      %v59 = vpop.permute.xlu0 %58
      %v61 = vmul.f32 %v59, %v51
      %63 = vrot.lane.b32.xlu0 %v56, 3
      %v64 = vpop.permute.xlu0 %63
      %67 = vrot.lane.b32.xlu0 %v61, 6
      %v68 = vpop.permute.xlu0 %67
      %vm70 = vcmask 23552
      %v71 = vsel %vm70, %v51, %v64
      %vm72 = vcmask 48128
      %v73 = vsel %vm72, %v71, %v68
      %74 = vset.pattern.permute.xlu0 1
      %75 = vperm.xlu0 %74, %v38
      %v76 = vpop.permute.xlu0 %75
      %v78 = vmul.f32 %v76, %v73
      %79 = vset.pattern.permute.xlu0 1
      %80 = vperm.xlu0 %79, %v39
      %v81 = vpop.permute.xlu0 %80
      %v83 = vmul.f32 %v81, %v73
      %85 = vrot.lane.b32.xlu0 %v78, 9
      %v86 = vpop.permute.xlu0 %85
      %89 = vrot.lane.b32.xlu0 %v83, 18
      %v90 = vpop.permute.xlu0 %89
      %vm92 = vcmask 72704
      %v93 = vsel %vm92, %v73, %v86
      %vm94 = vcmask 146432
      %v95 = vsel %vm94, %v93, %v90
      %96 = vset.pattern.permute.xlu0 0
      %97 = vperm.xlu0 %96, %v38
      %v98 = vpop.permute.xlu0 %97
      %v100 = vmul.f32 %v98, %v95
      %101 = vset.pattern.permute.xlu0 0
      %102 = vperm.xlu0 %101, %v39
      %v103 = vpop.permute.xlu0 %102
      %v105 = vmul.f32 %v103, %v95
      %107 = vrot.lane.b32.xlu0 %v100, 27
      %v108 = vpop.permute.xlu0 %107
      %111 = vrot.lane.b32.xlu0 %v105, 54
      %v112 = vpop.permute.xlu0 %111
      %vm114 = vcmask 220160
      %v115 = vsel %vm114, %v95, %v108
      %vm116 = vcmask 441344
      %v117 = vsel %vm116, %v115, %v112
      %vm118 = vcmask 662528
      %v119 = vsel %vm118, %v117, 0.0
      %120 = vst [vmem:[#allocation2] sm:$0xff] %v119
      %121 = vst [vmem:[#allocation3] sm:$0xff] 1.0
    $region17: #{tpu_custom_call.1} parent=1 // pred_fallthru
      _
    %v122 = vld [vmem:[#allocation2] sm:$0xff]
    %v123 = vld [vmem:[#allocation3] sm:$0xff]
    %v124 = vld [vmem:[#allocation4] sm:$0xff]
    %v125 = vld [vmem:[#allocation4 + $0x8] sm:$0xff]
    %v126 = vld [vmem:[#allocation4 + $0x10] sm:$0xff]
    %v127 = vld [vmem:[#allocation4 + $0x18] sm:$0xff]
    %v128 = vld [vmem:[#allocation4 + $0x20] sm:$0xff]
    %v129 = vld [vmem:[#allocation4 + $0x28] sm:$0xff]
    %v130 = vld [vmem:[#allocation4 + $0x30] sm:$0xff]
    %v131 = vld [vmem:[#allocation4 + $0x38] sm:$0xff]
    %v132 = vld [vmem:[#allocation4 + $0x40] sm:$0xff]
    %v133 = vld [vmem:[#allocation4 + $0x48] sm:$0xff]
    %v134 = vld [vmem:[#allocation4 + $0x50] sm:$0xff]
    %v135 = vld [vmem:[#allocation4 + $0x58] sm:$0xff]
    %v136 = vld [vmem:[#allocation4 + $0x60] sm:$0xff]
    %v137 = vld [vmem:[#allocation4 + $0x68] sm:$0xff]
    %v138 = vld [vmem:[#allocation4 + $0x70] sm:$0xff]
    %v139 = vld [vmem:[#allocation4 + $0x78] sm:$0xff]
    %140 = vmatprep.subr.mxu0 0.0
    %v141 = vand.u32 %v124, 4294901760
    %142 = vmatpush1.msra.mxu0 %v141
    %143 = vmatprep.subr.mxu0 0.0
    %v144 = vand.u32 %v125, 4294901760
    %145 = vmatpush1.msra.mxu0 %v144
    %146 = vmatprep.subr.mxu0 0.0
    %v147 = vand.u32 %v126, 4294901760
    %148 = vmatpush1.msra.mxu0 %v147
    %149 = vmatprep.subr.mxu0 0.0
    %v150 = vand.u32 %v127, 4294901760
    %151 = vmatpush1.msra.mxu0 %v150
    %152 = vmatprep.subr.mxu0 0.0
    %v153 = vand.u32 %v128, 4294901760
    %154 = vmatpush1.msra.mxu0 %v153
    %155 = vmatprep.subr.mxu0 0.0
    %v156 = vand.u32 %v129, 4294901760
    %157 = vmatpush1.msra.mxu0 %v156
    %158 = vmatprep.subr.mxu0 0.0
    %v159 = vand.u32 %v130, 4294901760
    %160 = vmatpush1.msra.mxu0 %v159
    %161 = vmatprep.subr.mxu0 0.0
    %v162 = vand.u32 %v131, 4294901760
    %163 = vmatpush1.msra.mxu0 %v162
    %164 = vmatprep.subr.mxu0 0.0
    %v165 = vand.u32 %v132, 4294901760
    %166 = vmatpush1.msra.mxu0 %v165
    %167 = vmatprep.subr.mxu0 0.0
    %v168 = vand.u32 %v133, 4294901760
    %169 = vmatpush1.msra.mxu0 %v168
    %170 = vmatprep.subr.mxu0 0.0
    %v171 = vand.u32 %v134, 4294901760
    %172 = vmatpush1.msra.mxu0 %v171
    %173 = vmatprep.subr.mxu0 0.0
    %v174 = vand.u32 %v135, 4294901760
    %175 = vmatpush1.msra.mxu0 %v174
    %176 = vmatprep.subr.mxu0 0.0
    %v177 = vand.u32 %v136, 4294901760
    %178 = vmatpush1.msra.mxu0 %v177
    %179 = vmatprep.subr.mxu0 0.0
    %v180 = vand.u32 %v137, 4294901760
    %181 = vmatpush1.msra.mxu0 %v180
    %182 = vmatprep.subr.mxu0 0.0
    %v183 = vand.u32 %v138, 4294901760
    %184 = vmatpush1.msra.mxu0 %v183
    %185 = vmatprep.subr.mxu0 0.0
    %v186 = vand.u32 %v139, 4294901760
    %187 = vmatpush1.msra.mxu0 %v186
    %188 = vmatprep.subr.mxu0 0.0
    %189 = vmatpush1.msra.mxu0 0.0
    %190 = vmatprep.subr.mxu0 0.0
    %191 = vmatpush1.msra.mxu0 0.0
    %192 = vmatprep.subr.mxu0 0.0
    %193 = vmatpush1.msra.mxu0 0.0
    %194 = vmatprep.subr.mxu0 0.0
    %195 = vmatpush1.msra.mxu0 0.0
    %196 = vmatprep.subr.mxu0 0.0
    %197 = vmatpush1.msra.mxu0 0.0
    %198 = vmatprep.subr.mxu0 0.0
    %199 = vmatpush1.msra.mxu0 0.0
    %200 = vmatprep.subr.mxu0 0.0
    %201 = vmatpush1.msra.mxu0 0.0
    %202 = vmatprep.subr.mxu0 0.0
    %203 = vmatpush1.msra.mxu0 0.0
    %204 = vmatprep.subr.mxu0 0.0
    %205 = vmatpush1.msra.mxu0 0.0
    %206 = vmatprep.subr.mxu0 0.0
    %207 = vmatpush1.msra.mxu0 0.0
    %208 = vmatprep.subr.mxu0 0.0
    %209 = vmatpush1.msra.mxu0 0.0
    %210 = vmatprep.subr.mxu0 0.0
    %211 = vmatpush1.msra.mxu0 0.0
    %212 = vmatprep.subr.mxu0 0.0
    %213 = vmatpush1.msra.mxu0 0.0
    %214 = vmatprep.subr.mxu0 0.0
    %215 = vmatpush1.msra.mxu0 0.0
    %216 = vmatprep.subr.mxu0 0.0
    %217 = vmatpush1.msra.mxu0 0.0
    %218 = vmatprep.subr.mxu0 0.0
    %219 = vmatpush1.msra.mxu0 0.0
    %220 = vmatprep.mubr.f32.mxu0 0.0
    %v221 = vand.u32 %v122, 4294901760
    %v222 = vsub.f32 %v122, %v221
    %v223 = vand.u32 %v222, 4294901760
    %v224 = vsub.f32 %v222, %v223
    %v225 = vand.u32 %v224, 4294901760
    %226 = vmatmul.mubr.f32.gmra.mrb[0].mxu0 %v225
    %v227 = vpop.f32.mrb[0].mxu0
    %v228 = vadd.f32 0.0, %v227
    %v229 = vpop.f32.mrb[0].mxu0
    %230 = vdwg.mxu0
    %231 = vmatprep.subr.mxu0 0.0
    %v232 = vand.u32 %v124, 4294901760
    %v233 = vsub.f32 %v124, %v232
    %v234 = vand.u32 %v233, 4294901760
    %v235 = vsub.f32 %v233, %v234
    %v236 = vand.u32 %v235, 4294901760
    %237 = vmatpush1.msra.mxu0 %v236
    %238 = vmatprep.subr.mxu0 0.0
    %v239 = vand.u32 %v125, 4294901760
    %v240 = vsub.f32 %v125, %v239
    %v241 = vand.u32 %v240, 4294901760
    %v242 = vsub.f32 %v240, %v241
    %v243 = vand.u32 %v242, 4294901760
    %244 = vmatpush1.msra.mxu0 %v243
    %245 = vmatprep.subr.mxu0 0.0
    %v246 = vand.u32 %v126, 4294901760
    %v247 = vsub.f32 %v126, %v246
    %v248 = vand.u32 %v247, 4294901760
    %v249 = vsub.f32 %v247, %v248
    %v250 = vand.u32 %v249, 4294901760
    %251 = vmatpush1.msra.mxu0 %v250
    %252 = vmatprep.subr.mxu0 0.0
    %v253 = vand.u32 %v127, 4294901760
    %v254 = vsub.f32 %v127, %v253
    %v255 = vand.u32 %v254, 4294901760
    %v256 = vsub.f32 %v254, %v255
    %v257 = vand.u32 %v256, 4294901760
    %258 = vmatpush1.msra.mxu0 %v257
    %259 = vmatprep.subr.mxu0 0.0
    %v260 = vand.u32 %v128, 4294901760
    %v261 = vsub.f32 %v128, %v260
    %v262 = vand.u32 %v261, 4294901760
    %v263 = vsub.f32 %v261, %v262
    %v264 = vand.u32 %v263, 4294901760
    %265 = vmatpush1.msra.mxu0 %v264
    %266 = vmatprep.subr.mxu0 0.0
    %v267 = vand.u32 %v129, 4294901760
    %v268 = vsub.f32 %v129, %v267
    %v269 = vand.u32 %v268, 4294901760
    %v270 = vsub.f32 %v268, %v269
    %v271 = vand.u32 %v270, 4294901760
    %272 = vmatpush1.msra.mxu0 %v271
    %273 = vmatprep.subr.mxu0 0.0
    %v274 = vand.u32 %v130, 4294901760
    %v275 = vsub.f32 %v130, %v274
    %v276 = vand.u32 %v275, 4294901760
    %v277 = vsub.f32 %v275, %v276
    %v278 = vand.u32 %v277, 4294901760
    %279 = vmatpush1.msra.mxu0 %v278
    %280 = vmatprep.subr.mxu0 0.0
    %v281 = vand.u32 %v131, 4294901760
    %v282 = vsub.f32 %v131, %v281
    %v283 = vand.u32 %v282, 4294901760
    %v284 = vsub.f32 %v282, %v283
    %v285 = vand.u32 %v284, 4294901760
    %286 = vmatpush1.msra.mxu0 %v285
    %287 = vmatprep.subr.mxu0 0.0
    %v288 = vand.u32 %v132, 4294901760
    %v289 = vsub.f32 %v132, %v288
    %v290 = vand.u32 %v289, 4294901760
    %v291 = vsub.f32 %v289, %v290
    %v292 = vand.u32 %v291, 4294901760
    %293 = vmatpush1.msra.mxu0 %v292
    %294 = vmatprep.subr.mxu0 0.0
    %v295 = vand.u32 %v133, 4294901760
    %v296 = vsub.f32 %v133, %v295
    %v297 = vand.u32 %v296, 4294901760
    %v298 = vsub.f32 %v296, %v297
    %v299 = vand.u32 %v298, 4294901760
    %300 = vmatpush1.msra.mxu0 %v299
    %301 = vmatprep.subr.mxu0 0.0
    %v302 = vand.u32 %v134, 4294901760
    %v303 = vsub.f32 %v134, %v302
    %v304 = vand.u32 %v303, 4294901760
    %v305 = vsub.f32 %v303, %v304
    %v306 = vand.u32 %v305, 4294901760
    %307 = vmatpush1.msra.mxu0 %v306
    %308 = vmatprep.subr.mxu0 0.0
    %v309 = vand.u32 %v135, 4294901760
    %v310 = vsub.f32 %v135, %v309
    %v311 = vand.u32 %v310, 4294901760
    %v312 = vsub.f32 %v310, %v311
    %v313 = vand.u32 %v312, 4294901760
    %314 = vmatpush1.msra.mxu0 %v313
    %315 = vmatprep.subr.mxu0 0.0
    %v316 = vand.u32 %v136, 4294901760
    %v317 = vsub.f32 %v136, %v316
    %v318 = vand.u32 %v317, 4294901760
    %v319 = vsub.f32 %v317, %v318
    %v320 = vand.u32 %v319, 4294901760
    %321 = vmatpush1.msra.mxu0 %v320
    %322 = vmatprep.subr.mxu0 0.0
    %v323 = vand.u32 %v137, 4294901760
    %v324 = vsub.f32 %v137, %v323
    %v325 = vand.u32 %v324, 4294901760
    %v326 = vsub.f32 %v324, %v325
    %v327 = vand.u32 %v326, 4294901760
    %328 = vmatpush1.msra.mxu0 %v327
    %329 = vmatprep.subr.mxu0 0.0
    %v330 = vand.u32 %v138, 4294901760
    %v331 = vsub.f32 %v138, %v330
    %v332 = vand.u32 %v331, 4294901760
    %v333 = vsub.f32 %v331, %v332
    %v334 = vand.u32 %v333, 4294901760
    %335 = vmatpush1.msra.mxu0 %v334
    %336 = vmatprep.subr.mxu0 0.0
    %v337 = vand.u32 %v139, 4294901760
    %v338 = vsub.f32 %v139, %v337
    %v339 = vand.u32 %v338, 4294901760
    %v340 = vsub.f32 %v338, %v339
    %v341 = vand.u32 %v340, 4294901760
    %342 = vmatpush1.msra.mxu0 %v341
    %343 = vmatprep.subr.mxu0 0.0
    %344 = vmatpush1.msra.mxu0 0.0
    %345 = vmatprep.subr.mxu0 0.0
    %346 = vmatpush1.msra.mxu0 0.0
    %347 = vmatprep.subr.mxu0 0.0
    %348 = vmatpush1.msra.mxu0 0.0
    %349 = vmatprep.subr.mxu0 0.0
    %350 = vmatpush1.msra.mxu0 0.0
    %351 = vmatprep.subr.mxu0 0.0
    %352 = vmatpush1.msra.mxu0 0.0
    %353 = vmatprep.subr.mxu0 0.0
    %354 = vmatpush1.msra.mxu0 0.0
    %355 = vmatprep.subr.mxu0 0.0
    %356 = vmatpush1.msra.mxu0 0.0
    %357 = vmatprep.subr.mxu0 0.0
    %358 = vmatpush1.msra.mxu0 0.0
    %359 = vmatprep.subr.mxu0 0.0
    %360 = vmatpush1.msra.mxu0 0.0
    %361 = vmatprep.subr.mxu0 0.0
    %362 = vmatpush1.msra.mxu0 0.0
    %363 = vmatprep.subr.mxu0 0.0
    %364 = vmatpush1.msra.mxu0 0.0
    %365 = vmatprep.subr.mxu0 0.0
    %366 = vmatpush1.msra.mxu0 0.0
    %367 = vmatprep.subr.mxu0 0.0
    %368 = vmatpush1.msra.mxu0 0.0
    %369 = vmatprep.subr.mxu0 0.0
    %370 = vmatpush1.msra.mxu0 0.0
    %371 = vmatprep.subr.mxu0 0.0
    %372 = vmatpush1.msra.mxu0 0.0
    %373 = vmatprep.subr.mxu0 0.0
    %374 = vmatpush1.msra.mxu0 0.0
    %375 = vmatprep.mubr.f32.mxu0 0.0
    %v376 = vand.u32 %v122, 4294901760
    %377 = vmatmul.mubr.f32.gmra.mrb[0].mxu0 %v376
    %v378 = vpop.f32.mrb[0].mxu0
    %v379 = vadd.f32 %v228, %v378
    %v380 = vpop.f32.mrb[0].mxu0
    %381 = vdwg.mxu0
    %382 = vmatprep.subr.mxu0 0.0
    %v383 = vand.u32 %v124, 4294901760
    %v384 = vsub.f32 %v124, %v383
    %385 = vmatpush1.msra.mxu0 %v384
    %386 = vmatprep.subr.mxu0 0.0
    %v387 = vand.u32 %v125, 4294901760
    %v388 = vsub.f32 %v125, %v387
    %389 = vmatpush1.msra.mxu0 %v388
    %390 = vmatprep.subr.mxu0 0.0
    %v391 = vand.u32 %v126, 4294901760
    %v392 = vsub.f32 %v126, %v391
    %393 = vmatpush1.msra.mxu0 %v392
    %394 = vmatprep.subr.mxu0 0.0
    %v395 = vand.u32 %v127, 4294901760
    %v396 = vsub.f32 %v127, %v395
    %397 = vmatpush1.msra.mxu0 %v396
    %398 = vmatprep.subr.mxu0 0.0
    %v399 = vand.u32 %v128, 4294901760
    %v400 = vsub.f32 %v128, %v399
    %401 = vmatpush1.msra.mxu0 %v400
    %402 = vmatprep.subr.mxu0 0.0
    %v403 = vand.u32 %v129, 4294901760
    %v404 = vsub.f32 %v129, %v403
    %405 = vmatpush1.msra.mxu0 %v404
    %406 = vmatprep.subr.mxu0 0.0
    %v407 = vand.u32 %v130, 4294901760
    %v408 = vsub.f32 %v130, %v407
    %409 = vmatpush1.msra.mxu0 %v408
    %410 = vmatprep.subr.mxu0 0.0
    %v411 = vand.u32 %v131, 4294901760
    %v412 = vsub.f32 %v131, %v411
    %413 = vmatpush1.msra.mxu0 %v412
    %414 = vmatprep.subr.mxu0 0.0
    %v415 = vand.u32 %v132, 4294901760
    %v416 = vsub.f32 %v132, %v415
    %417 = vmatpush1.msra.mxu0 %v416
    %418 = vmatprep.subr.mxu0 0.0
    %v419 = vand.u32 %v133, 4294901760
    %v420 = vsub.f32 %v133, %v419
    %421 = vmatpush1.msra.mxu0 %v420
    %422 = vmatprep.subr.mxu0 0.0
    %v423 = vand.u32 %v134, 4294901760
    %v424 = vsub.f32 %v134, %v423
    %425 = vmatpush1.msra.mxu0 %v424
    %426 = vmatprep.subr.mxu0 0.0
    %v427 = vand.u32 %v135, 4294901760
    %v428 = vsub.f32 %v135, %v427
    %429 = vmatpush1.msra.mxu0 %v428
    %430 = vmatprep.subr.mxu0 0.0
    %v431 = vand.u32 %v136, 4294901760
    %v432 = vsub.f32 %v136, %v431
    %433 = vmatpush1.msra.mxu0 %v432
    %434 = vmatprep.subr.mxu0 0.0
    %v435 = vand.u32 %v137, 4294901760
    %v436 = vsub.f32 %v137, %v435
    %437 = vmatpush1.msra.mxu0 %v436
    %438 = vmatprep.subr.mxu0 0.0
    %v439 = vand.u32 %v138, 4294901760
    %v440 = vsub.f32 %v138, %v439
    %441 = vmatpush1.msra.mxu0 %v440
    %442 = vmatprep.subr.mxu0 0.0
    %v443 = vand.u32 %v139, 4294901760
    %v444 = vsub.f32 %v139, %v443
    %445 = vmatpush1.msra.mxu0 %v444
    %446 = vmatprep.subr.mxu0 0.0
    %447 = vmatpush1.msra.mxu0 0.0
    %448 = vmatprep.subr.mxu0 0.0
    %449 = vmatpush1.msra.mxu0 0.0
    %450 = vmatprep.subr.mxu0 0.0
    %451 = vmatpush1.msra.mxu0 0.0
    %452 = vmatprep.subr.mxu0 0.0
    %453 = vmatpush1.msra.mxu0 0.0
    %454 = vmatprep.subr.mxu0 0.0
    %455 = vmatpush1.msra.mxu0 0.0
    %456 = vmatprep.subr.mxu0 0.0
    %457 = vmatpush1.msra.mxu0 0.0
    %458 = vmatprep.subr.mxu0 0.0
    %459 = vmatpush1.msra.mxu0 0.0
    %460 = vmatprep.subr.mxu0 0.0
    %461 = vmatpush1.msra.mxu0 0.0
    %462 = vmatprep.subr.mxu0 0.0
    %463 = vmatpush1.msra.mxu0 0.0
    %464 = vmatprep.subr.mxu0 0.0
    %465 = vmatpush1.msra.mxu0 0.0
    %466 = vmatprep.subr.mxu0 0.0
    %467 = vmatpush1.msra.mxu0 0.0
    %468 = vmatprep.subr.mxu0 0.0
    %469 = vmatpush1.msra.mxu0 0.0
    %470 = vmatprep.subr.mxu0 0.0
    %471 = vmatpush1.msra.mxu0 0.0
    %472 = vmatprep.subr.mxu0 0.0
    %473 = vmatpush1.msra.mxu0 0.0
    %474 = vmatprep.subr.mxu0 0.0
    %475 = vmatpush1.msra.mxu0 0.0
    %476 = vmatprep.subr.mxu0 0.0
    %477 = vmatpush1.msra.mxu0 0.0
    %478 = vmatprep.mubr.f32.mxu0 0.0
    %v479 = vand.u32 %v122, 4294901760
    %v480 = vsub.f32 %v122, %v479
    %481 = vmatmul.mubr.f32.gmra.mrb[0].mxu0 %v480
    %v482 = vpop.f32.mrb[0].mxu0
    %v483 = vadd.f32 %v379, %v482
    %v484 = vpop.f32.mrb[0].mxu0
    %485 = vdwg.mxu0
    %486 = vmatprep.subr.mxu0 0.0
    %v487 = vand.u32 %v124, 4294901760
    %488 = vmatpush1.msra.mxu0 %v487
    %489 = vmatprep.subr.mxu0 0.0
    %v490 = vand.u32 %v125, 4294901760
    %491 = vmatpush1.msra.mxu0 %v490
    %492 = vmatprep.subr.mxu0 0.0
    %v493 = vand.u32 %v126, 4294901760
    %494 = vmatpush1.msra.mxu0 %v493
    %495 = vmatprep.subr.mxu0 0.0
    %v496 = vand.u32 %v127, 4294901760
    %497 = vmatpush1.msra.mxu0 %v496
    %498 = vmatprep.subr.mxu0 0.0
    %v499 = vand.u32 %v128, 4294901760
    %500 = vmatpush1.msra.mxu0 %v499
    %501 = vmatprep.subr.mxu0 0.0
    %v502 = vand.u32 %v129, 4294901760
    %503 = vmatpush1.msra.mxu0 %v502
    %504 = vmatprep.subr.mxu0 0.0
    %v505 = vand.u32 %v130, 4294901760
    %506 = vmatpush1.msra.mxu0 %v505
    %507 = vmatprep.subr.mxu0 0.0
    %v508 = vand.u32 %v131, 4294901760
    %509 = vmatpush1.msra.mxu0 %v508
    %510 = vmatprep.subr.mxu0 0.0
    %v511 = vand.u32 %v132, 4294901760
    %512 = vmatpush1.msra.mxu0 %v511
    %513 = vmatprep.subr.mxu0 0.0
    %v514 = vand.u32 %v133, 4294901760
    %515 = vmatpush1.msra.mxu0 %v514
    %516 = vmatprep.subr.mxu0 0.0
    %v517 = vand.u32 %v134, 4294901760
    %518 = vmatpush1.msra.mxu0 %v517
    %519 = vmatprep.subr.mxu0 0.0
    %v520 = vand.u32 %v135, 4294901760
    %521 = vmatpush1.msra.mxu0 %v520
    %522 = vmatprep.subr.mxu0 0.0
    %v523 = vand.u32 %v136, 4294901760
    %524 = vmatpush1.msra.mxu0 %v523
    %525 = vmatprep.subr.mxu0 0.0
    %v526 = vand.u32 %v137, 4294901760
    %527 = vmatpush1.msra.mxu0 %v526
    %528 = vmatprep.subr.mxu0 0.0
    %v529 = vand.u32 %v138, 4294901760
    %530 = vmatpush1.msra.mxu0 %v529
    %531 = vmatprep.subr.mxu0 0.0
    %v532 = vand.u32 %v139, 4294901760
    %533 = vmatpush1.msra.mxu0 %v532
    %534 = vmatprep.subr.mxu0 0.0
    %535 = vmatpush1.msra.mxu0 0.0
    %536 = vmatprep.subr.mxu0 0.0
    %537 = vmatpush1.msra.mxu0 0.0
    %538 = vmatprep.subr.mxu0 0.0
    %539 = vmatpush1.msra.mxu0 0.0
    %540 = vmatprep.subr.mxu0 0.0
    %541 = vmatpush1.msra.mxu0 0.0
    %542 = vmatprep.subr.mxu0 0.0
    %543 = vmatpush1.msra.mxu0 0.0
    %544 = vmatprep.subr.mxu0 0.0
    %545 = vmatpush1.msra.mxu0 0.0
    %546 = vmatprep.subr.mxu0 0.0
    %547 = vmatpush1.msra.mxu0 0.0
    %548 = vmatprep.subr.mxu0 0.0
    %549 = vmatpush1.msra.mxu0 0.0
    %550 = vmatprep.subr.mxu0 0.0
    %551 = vmatpush1.msra.mxu0 0.0
    %552 = vmatprep.subr.mxu0 0.0
    %553 = vmatpush1.msra.mxu0 0.0
    %554 = vmatprep.subr.mxu0 0.0
    %555 = vmatpush1.msra.mxu0 0.0
    %556 = vmatprep.subr.mxu0 0.0
    %557 = vmatpush1.msra.mxu0 0.0
    %558 = vmatprep.subr.mxu0 0.0
    %559 = vmatpush1.msra.mxu0 0.0
    %560 = vmatprep.subr.mxu0 0.0
    %561 = vmatpush1.msra.mxu0 0.0
    %562 = vmatprep.subr.mxu0 0.0
    %563 = vmatpush1.msra.mxu0 0.0
    %564 = vmatprep.subr.mxu0 0.0
    %565 = vmatpush1.msra.mxu0 0.0
    %566 = vmatprep.mubr.f32.mxu0 0.0
    %v567 = vand.u32 %v122, 4294901760
    %v568 = vsub.f32 %v122, %v567
    %v569 = vand.u32 %v568, 4294901760
    %570 = vmatmul.mubr.f32.gmra.mrb[0].mxu0 %v569
    %v571 = vpop.f32.mrb[0].mxu0
    %v572 = vadd.f32 %v483, %v571
    %v573 = vpop.f32.mrb[0].mxu0
    %574 = vdwg.mxu0
    %575 = vmatprep.subr.mxu0 0.0
    %v576 = vand.u32 %v124, 4294901760
    %v577 = vsub.f32 %v124, %v576
    %v578 = vand.u32 %v577, 4294901760
    %579 = vmatpush1.msra.mxu0 %v578
    %580 = vmatprep.subr.mxu0 0.0
    %v581 = vand.u32 %v125, 4294901760
    %v582 = vsub.f32 %v125, %v581
    %v583 = vand.u32 %v582, 4294901760
    %584 = vmatpush1.msra.mxu0 %v583
    %585 = vmatprep.subr.mxu0 0.0
    %v586 = vand.u32 %v126, 4294901760
    %v587 = vsub.f32 %v126, %v586
    %v588 = vand.u32 %v587, 4294901760
    %589 = vmatpush1.msra.mxu0 %v588
    %590 = vmatprep.subr.mxu0 0.0
    %v591 = vand.u32 %v127, 4294901760
    %v592 = vsub.f32 %v127, %v591
    %v593 = vand.u32 %v592, 4294901760
    %594 = vmatpush1.msra.mxu0 %v593
    %595 = vmatprep.subr.mxu0 0.0
    %v596 = vand.u32 %v128, 4294901760
    %v597 = vsub.f32 %v128, %v596
    %v598 = vand.u32 %v597, 4294901760
    %599 = vmatpush1.msra.mxu0 %v598
    %600 = vmatprep.subr.mxu0 0.0
    %v601 = vand.u32 %v129, 4294901760
    %v602 = vsub.f32 %v129, %v601
    %v603 = vand.u32 %v602, 4294901760
    %604 = vmatpush1.msra.mxu0 %v603
    %605 = vmatprep.subr.mxu0 0.0
    %v606 = vand.u32 %v130, 4294901760
    %v607 = vsub.f32 %v130, %v606
    %v608 = vand.u32 %v607, 4294901760
    %609 = vmatpush1.msra.mxu0 %v608
    %610 = vmatprep.subr.mxu0 0.0
    %v611 = vand.u32 %v131, 4294901760
    %v612 = vsub.f32 %v131, %v611
    %v613 = vand.u32 %v612, 4294901760
    %614 = vmatpush1.msra.mxu0 %v613
    %615 = vmatprep.subr.mxu0 0.0
    %v616 = vand.u32 %v132, 4294901760
    %v617 = vsub.f32 %v132, %v616
    %v618 = vand.u32 %v617, 4294901760
    %619 = vmatpush1.msra.mxu0 %v618
    %620 = vmatprep.subr.mxu0 0.0
    %v621 = vand.u32 %v133, 4294901760
    %v622 = vsub.f32 %v133, %v621
    %v623 = vand.u32 %v622, 4294901760
    %624 = vmatpush1.msra.mxu0 %v623
    %625 = vmatprep.subr.mxu0 0.0
    %v626 = vand.u32 %v134, 4294901760
    %v627 = vsub.f32 %v134, %v626
    %v628 = vand.u32 %v627, 4294901760
    %629 = vmatpush1.msra.mxu0 %v628
    %630 = vmatprep.subr.mxu0 0.0
    %v631 = vand.u32 %v135, 4294901760
    %v632 = vsub.f32 %v135, %v631
    %v633 = vand.u32 %v632, 4294901760
    %634 = vmatpush1.msra.mxu0 %v633
    %635 = vmatprep.subr.mxu0 0.0
    %v636 = vand.u32 %v136, 4294901760
    %v637 = vsub.f32 %v136, %v636
    %v638 = vand.u32 %v637, 4294901760
    %639 = vmatpush1.msra.mxu0 %v638
    %640 = vmatprep.subr.mxu0 0.0
    %v641 = vand.u32 %v137, 4294901760
    %v642 = vsub.f32 %v137, %v641
    %v643 = vand.u32 %v642, 4294901760
    %644 = vmatpush1.msra.mxu0 %v643
    %645 = vmatprep.subr.mxu0 0.0
    %v646 = vand.u32 %v138, 4294901760
    %v647 = vsub.f32 %v138, %v646
    %v648 = vand.u32 %v647, 4294901760
    %649 = vmatpush1.msra.mxu0 %v648
    %650 = vmatprep.subr.mxu0 0.0
    %v651 = vand.u32 %v139, 4294901760
    %v652 = vsub.f32 %v139, %v651
    %v653 = vand.u32 %v652, 4294901760
    %654 = vmatpush1.msra.mxu0 %v653
    %655 = vmatprep.subr.mxu0 0.0
    %656 = vmatpush1.msra.mxu0 0.0
    %657 = vmatprep.subr.mxu0 0.0
    %658 = vmatpush1.msra.mxu0 0.0
    %659 = vmatprep.subr.mxu0 0.0
    %660 = vmatpush1.msra.mxu0 0.0
    %661 = vmatprep.subr.mxu0 0.0
    %662 = vmatpush1.msra.mxu0 0.0
    %663 = vmatprep.subr.mxu0 0.0
    %664 = vmatpush1.msra.mxu0 0.0
    %665 = vmatprep.subr.mxu0 0.0
    %666 = vmatpush1.msra.mxu0 0.0
    %667 = vmatprep.subr.mxu0 0.0
    %668 = vmatpush1.msra.mxu0 0.0
    %669 = vmatprep.subr.mxu0 0.0
    %670 = vmatpush1.msra.mxu0 0.0
    %671 = vmatprep.subr.mxu0 0.0
    %672 = vmatpush1.msra.mxu0 0.0
    %673 = vmatprep.subr.mxu0 0.0
    %674 = vmatpush1.msra.mxu0 0.0
    %675 = vmatprep.subr.mxu0 0.0
    %676 = vmatpush1.msra.mxu0 0.0
    %677 = vmatprep.subr.mxu0 0.0
    %678 = vmatpush1.msra.mxu0 0.0
    %679 = vmatprep.subr.mxu0 0.0
    %680 = vmatpush1.msra.mxu0 0.0
    %681 = vmatprep.subr.mxu0 0.0
    %682 = vmatpush1.msra.mxu0 0.0
    %683 = vmatprep.subr.mxu0 0.0
    %684 = vmatpush1.msra.mxu0 0.0
    %685 = vmatprep.subr.mxu0 0.0
    %686 = vmatpush1.msra.mxu0 0.0
    %687 = vmatprep.mubr.f32.mxu0 0.0
    %v688 = vand.u32 %v122, 4294901760
    %689 = vmatmul.mubr.f32.gmra.mrb[0].mxu0 %v688
    %v690 = vpop.f32.mrb[0].mxu0
    %v691 = vadd.f32 %v572, %v690
    %v692 = vpop.f32.mrb[0].mxu0
    %693 = vdwg.mxu0
    %694 = vmatprep.subr.mxu0 0.0
    %v695 = vand.u32 %v124, 4294901760
    %696 = vmatpush1.msra.mxu0 %v695
    %697 = vmatprep.subr.mxu0 0.0
    %v698 = vand.u32 %v125, 4294901760
    %699 = vmatpush1.msra.mxu0 %v698
    %700 = vmatprep.subr.mxu0 0.0
    %v701 = vand.u32 %v126, 4294901760
    %702 = vmatpush1.msra.mxu0 %v701
    %703 = vmatprep.subr.mxu0 0.0
    %v704 = vand.u32 %v127, 4294901760
    %705 = vmatpush1.msra.mxu0 %v704
    %706 = vmatprep.subr.mxu0 0.0
    %v707 = vand.u32 %v128, 4294901760
    %708 = vmatpush1.msra.mxu0 %v707
    %709 = vmatprep.subr.mxu0 0.0
    %v710 = vand.u32 %v129, 4294901760
    %711 = vmatpush1.msra.mxu0 %v710
    %712 = vmatprep.subr.mxu0 0.0
    %v713 = vand.u32 %v130, 4294901760
    %714 = vmatpush1.msra.mxu0 %v713
    %715 = vmatprep.subr.mxu0 0.0
    %v716 = vand.u32 %v131, 4294901760
    %717 = vmatpush1.msra.mxu0 %v716
    %718 = vmatprep.subr.mxu0 0.0
    %v719 = vand.u32 %v132, 4294901760
    %720 = vmatpush1.msra.mxu0 %v719
    %721 = vmatprep.subr.mxu0 0.0
    %v722 = vand.u32 %v133, 4294901760
    %723 = vmatpush1.msra.mxu0 %v722
    %724 = vmatprep.subr.mxu0 0.0
    %v725 = vand.u32 %v134, 4294901760
    %726 = vmatpush1.msra.mxu0 %v725
    %727 = vmatprep.subr.mxu0 0.0
    %v728 = vand.u32 %v135, 4294901760
    %729 = vmatpush1.msra.mxu0 %v728
    %730 = vmatprep.subr.mxu0 0.0
    %v731 = vand.u32 %v136, 4294901760
    %732 = vmatpush1.msra.mxu0 %v731
    %733 = vmatprep.subr.mxu0 0.0
    %v734 = vand.u32 %v137, 4294901760
    %735 = vmatpush1.msra.mxu0 %v734
    %736 = vmatprep.subr.mxu0 0.0
    %v737 = vand.u32 %v138, 4294901760
    %738 = vmatpush1.msra.mxu0 %v737
    %739 = vmatprep.subr.mxu0 0.0
    %v740 = vand.u32 %v139, 4294901760
    %741 = vmatpush1.msra.mxu0 %v740
    %742 = vmatprep.subr.mxu0 0.0
    %743 = vmatpush1.msra.mxu0 0.0
    %744 = vmatprep.subr.mxu0 0.0
    %745 = vmatpush1.msra.mxu0 0.0
    %746 = vmatprep.subr.mxu0 0.0
    %747 = vmatpush1.msra.mxu0 0.0
    %748 = vmatprep.subr.mxu0 0.0
    %749 = vmatpush1.msra.mxu0 0.0
    %750 = vmatprep.subr.mxu0 0.0
    %751 = vmatpush1.msra.mxu0 0.0
    %752 = vmatprep.subr.mxu0 0.0
    %753 = vmatpush1.msra.mxu0 0.0
    %754 = vmatprep.subr.mxu0 0.0
    %755 = vmatpush1.msra.mxu0 0.0
    %756 = vmatprep.subr.mxu0 0.0
    %757 = vmatpush1.msra.mxu0 0.0
    %758 = vmatprep.subr.mxu0 0.0
    %759 = vmatpush1.msra.mxu0 0.0
    %760 = vmatprep.subr.mxu0 0.0
    %761 = vmatpush1.msra.mxu0 0.0
    %762 = vmatprep.subr.mxu0 0.0
    %763 = vmatpush1.msra.mxu0 0.0
    %764 = vmatprep.subr.mxu0 0.0
    %765 = vmatpush1.msra.mxu0 0.0
    %766 = vmatprep.subr.mxu0 0.0
    %767 = vmatpush1.msra.mxu0 0.0
    %768 = vmatprep.subr.mxu0 0.0
    %769 = vmatpush1.msra.mxu0 0.0
    %770 = vmatprep.subr.mxu0 0.0
    %771 = vmatpush1.msra.mxu0 0.0
    %772 = vmatprep.subr.mxu0 0.0
    %773 = vmatpush1.msra.mxu0 0.0
    %774 = vmatprep.mubr.f32.mxu0 0.0
    %v775 = vand.u32 %v122, 4294901760
    %776 = vmatmul.mubr.f32.gmra.mrb[0].mxu0 %v775
    %v777 = vpop.f32.mrb[0].mxu0
    %v778 = vadd.f32 %v691, %v777
    %v779 = vpop.f32.mrb[0].mxu0
    %780 = vdwg.mxu0
    %v781 = vadd.f32 %v123, %v778
    %782 = vst [vmem:[#allocation3] sm:$0xff] %v781
    // Predicated region
    $region18: #{tpu_custom_call.1} parent=1 // pred_check
      %p783 = pneg %p26
    $region19: #{tpu_custom_call.1} parent=1 // pred_check_branch
      %785 = sbr.rel (%p783) target = $region21
    $region20: #{tpu_custom_call.1} parent=1 // pred_region
      %v786 = vld [vmem:[#allocation3] sm:$0xff]
      %787 = vst [vmem:[#allocation7] sm:$0xff] %v786
    $region21: #{tpu_custom_call.1} parent=1 // pred_fallthru
      _
    // Predicated region
    $region22: #{tpu_custom_call.1} parent=1 // pred_check
      _
    $region23: #{tpu_custom_call.1} parent=1 // pred_check_branch
      %789 = sbr.rel (0) target = $region25
    $region24: #{tpu_custom_call.1} parent=1 // pred_region
      %s791 = ssub.s32 128, 128
      %792 = vsyncadd [#allocation6], %s791
      %s794 = sshll.u32 [#allocation7], 4
      %s795 = int_to_ptr.vmem [resolvable:$true] %s794
      %797 = dma.vmem_to_hbm [thread:$0]  %s795, 128, %s2, [#allocation6]
    $region25: #{tpu_custom_call.1} parent=1 // pred_fallthru
      _
    // Predicated region
    $region26: #{tpu_custom_call.1} parent=1 // pred_check
      _
    $region27: #{tpu_custom_call.1} parent=1 // pred_check_branch
      %799 = sbr.rel (0) target = $region29
    $region28: #{tpu_custom_call.1} parent=1 // pred_region
      %800 = dma.done [#allocation6], 128
    $region29: #{tpu_custom_call.1} parent=1 // pred_fallthru
      _
    %801 = vsyncpa [#allocation5], 1
    %802 = vsyncpa [#allocation6], 1

</llo_original>
